<compile_context>
chip_gen: v5e
topology: v5e:2x2
jax: 0.10.0
libtpu: 0.0.40
codegen_flags: <defaults>
</compile_context>

<pallas_src>
import jax
import jax.numpy as jnp
from jax.experimental import pallas as pl
from jax.experimental.pallas import tpu as pltpu

LANE = 128


def _round_up(a, m):
    return ((a + m - 1) // m) * m


def _resident_spec(shape):
    """BlockSpec for a weight/bias resident in VMEM across all batch tiles
    (constant index_map -> DMA'd once).  Single-buffered: double-buffering a
    constant block wastes VMEM for zero benefit."""
    try:
        return pl.BlockSpec(shape, lambda i: (0, 0), pipeline_mode=pl.Buffered(1))
    except TypeError:  # older jax without pipeline_mode kwarg
        return pl.BlockSpec(shape, lambda i: (0, 0))


def _tanh_dtype(weight_dtype):
    """bf16 tanh on v6e/v7x (bf16 EUP, ~2x transcendental throughput, one
    fewer cast per layer); f32 tanh on v5e/older (no bf16 VPU/EUP) or on the
    full-precision f32-weight fallback path."""
    if weight_dtype != jnp.bfloat16:
        return jnp.float32
    try:
        kind = jax.devices()[0].device_kind.lower()
    except Exception:
        return jnp.float32
    for old in ("v2", "v3", "v4", "v5"):
        if old in kind:
            return jnp.float32
    return jnp.bfloat16


def _make_mlp_kernel(split, act_dtype):
    """Fused 5-layer MLP kernel. bf16 (or f32) MXU operands, f32 accumulation,
    f32 bias; optional 2-way row-half interleave for MXU/EUP overlap."""

    def kernel(x_ref, w1, b1, w2, b2, w3, b3, w4, b4, w5, b5, o_ref):
        hidden_wb = ((w1, b1), (w2, b2), (w3, b3), (w4, b4))

        def hidden_layer(h, w_ref, b_ref):
            acc = jnp.dot(h.astype(w_ref.dtype), w_ref[...],
                          preferred_element_type=jnp.float32) + b_ref[...]
            # Dropout(p=0.001) is identity at eval -> no-op.
            return jnp.tanh(acc.astype(act_dtype))

        def final_layer(h, w_ref, b_ref):
            acc = jnp.dot(h.astype(w_ref.dtype), w_ref[...],
                          preferred_element_type=jnp.float32) + b_ref[...]
            return acc.astype(o_ref.dtype)

        x = x_ref[...]
        if split:
            half = x.shape[0] // 2          # static; tb % 16 == 0 -> 8-aligned
            hs = [x[:half], x[half:]]       # two independent dependency chains
        else:
            hs = [x]
        for w_ref, b_ref in hidden_wb:      # unrolled over the 4 hidden layers
            hs = [hidden_layer(h, w_ref, b_ref) for h in hs]
        outs = [final_layer(h, w5, b5) for h in hs]
        if split:
            half = outs[0].shape[0]
            o_ref[:half, :] = outs[0]
            o_ref[half:, :] = outs[1]
        else:
            o_ref[...] = outs[0]

    return kernel


def prepare_params(params, *, weight_dtype=jnp.bfloat16, pad_output=False):
    """One-time (load-time) parameter prep.  Do NOT call per forward:
      * zero-pads hidden_dim to a multiple of 128 lanes,
      * optionally zero-pads output_dim to 128 (lane-dense output slab),
      * casts weights to the MXU operand dtype (bf16 default; pass
        jnp.float32 for a full-precision fallback).  Biases stay f32.
    Zero padding is exact: padded hidden units get 0 pre-activation, tanh(0)=0,
    and zero outgoing weights, so results match the unpadded network."""
    n = len(params)
    input_dim = params[0][0].shape[0]
    hidden_dim = params[0][0].shape[1]
    output_dim = params[-1][0].shape[1]
    hp = _round_up(hidden_dim, LANE)
    out_w = _round_up(output_dim, LANE) if pad_output else output_dim

    def pad2(a, rows, cols):
        z = jnp.zeros((rows, cols), a.dtype)
        return z.at[:a.shape[0], :a.shape[1]].set(a)

    layers = []
    for idx, (w, b) in enumerate(params):
        rows = input_dim if idx == 0 else hp
        cols = out_w if idx == n - 1 else hp
        layers.append((pad2(w, rows, cols).astype(weight_dtype),
                       pad2(b.reshape(1, -1), 1, cols).astype(jnp.float32)))
    return {"layers": tuple(layers),
            "input_dim": input_dim, "hidden_pad": hp,
            "output_dim": output_dim, "out_width": out_w}


def improved_nn_forward(x, prepped, *, block_batch=None):
    """x: [batch, input_dim] f32; prepped: output of prepare_params().
    Returns [batch, output_dim] f32."""
    batch, input_dim = x.shape
    assert input_dim == prepped["input_dim"]
    layers = prepped["layers"]
    hp = prepped["hidden_pad"]
    out_w = prepped["out_width"]
    output_dim = prepped["output_dim"]

    # Batch tile: big tiles when the net is tiny (per-step overhead and MXU
    # ramp dominate), but always >= 2 grid steps when batch allows so the
    # "parallel" batch axis can shard across v7x's two TensorCores.
    if block_batch is None:
        block_batch = 2048 if hp <= 256 else (512 if hp <= 1024 else 256)
    if batch > 8:
        tb = min(block_batch, _round_up(pl.cdiv(batch, 2), 8))
        if tb >= 16:
            tb = (tb // 16) * 16   # keep both kernel sub-tiles 8-row aligned
    else:
        tb = batch
    grid = (pl.cdiv(batch, tb),)
    # NOTE: when batch % tb != 0 the last tile reads rows past the end of x;
    # those rows are computed on unspecified data and their output rows are
    # discarded by the masked writeback (benign, math is row-independent).
    split = tb >= 16 and tb % 16 == 0

    act_dtype = _tanh_dtype(layers[0][0].dtype)
    kernel = _make_mlp_kernel(split, act_dtype)

    flat_args = [x]
    in_specs = [pl.BlockSpec((tb, input_dim), lambda i: (i, 0))]
    for w, b in layers:
        flat_args += [w, b]
        in_specs += [_resident_spec(w.shape), _resident_spec(b.shape)]

    # VMEM budget: resident (single-buffered) weights + double-buffered x/out
    # tiles + headroom for the (tb, hidden_pad) intermediates.
    resident = sum(int(w.size) * w.dtype.itemsize + int(b.size) * b.dtype.itemsize
                   for w, b in layers)
    io_tiles = 2 * tb * (input_dim + out_w) * 4
    scratch = 4 * tb * hp * 4
    vmem_limit = int(min(60 * 2**20, max(32 * 2**20, resident + io_tiles + scratch)))

    flops = 2 * batch * (input_dim * hp + 3 * hp * hp + hp * out_w)
    transcendentals = 4 * batch * hp
    bytes_accessed = int(x.size * x.dtype.itemsize + resident + batch * out_w * 4)

    out = pl.pallas_call(
        kernel,
        out_shape=jax.ShapeDtypeStruct((batch, out_w), jnp.float32),
        grid=grid,
        in_specs=in_specs,
        out_specs=pl.BlockSpec((tb, out_w), lambda i: (i, 0)),
        compiler_params=pltpu.CompilerParams(
            dimension_semantics=("parallel",),
            vmem_limit_bytes=vmem_limit),
        cost_estimate=pl.CostEstimate(flops=flops,
                                      transcendentals=transcendentals,
                                      bytes_accessed=bytes_accessed),
    )(*flat_args)

    if out_w != output_dim:
        out = out[:, :output_dim]
    return out


def init_params(key, input_dim, hidden_dim, output_dim):
    """Deterministic synthetic parameter init (matches nn.Linear shapes)."""
    dims = [(input_dim, hidden_dim),
            (hidden_dim, hidden_dim),
            (hidden_dim, hidden_dim),
            (hidden_dim, hidden_dim),
            (hidden_dim, output_dim)]
    params = []
    for fan_in, fan_out in dims:
        key, kw, kb = jax.random.split(key, 3)
        bound = 1.0 / jnp.sqrt(jnp.float32(fan_in))
        w = jax.random.uniform(kw, (fan_in, fan_out), jnp.float32, -bound, bound)
        b = jax.random.uniform(kb, (1, fan_out), jnp.float32, -bound, bound)
        params.append((w, b))
    return params


def reference_forward(x, params):
    """Pure-JAX f32 reference of the PyTorch forward (dropout=identity at eval)."""
    h = x
    for i, (w, b) in enumerate(params):
        h = h @ w + b
        if i < len(params) - 1:
            h = jnp.tanh(h)
    return h


if __name__ == "__main__":
    # Small shapes consistent with a PINN-style MLP.
    input_dim, hidden_dim, output_dim = 4, 32, 2

    key = jax.random.PRNGKey(0)
    key, kx = jax.random.split(key)
    params = init_params(key, input_dim, hidden_dim, output_dim)
    prepped = prepare_params(params)          # one-time, load-time prep

    # 1) Small batch: single tile, no split.
    x_small = jax.random.normal(kx, (8, input_dim), jnp.float32)
    out_small = jax.block_until_ready(improved_nn_forward(x_small, prepped))
    ref_small = reference_forward(x_small, params)
    assert out_small.shape == (8, output_dim)
    assert jnp.allclose(out_small, ref_small, atol=3e-2, rtol=3e-2), "small-batch mismatch"

    # 2) Larger batch: multi-step grid (megacore-shardable), 2-way sub-tile
    #    interleave, and a partial last tile.
    key, kx2 = jax.random.split(key)
    x_big = jax.random.normal(kx2, (200, input_dim), jnp.float32)
    out_big = jax.block_until_ready(improved_nn_forward(x_big, prepped))
    ref_big = reference_forward(x_big, params)
    assert out_big.shape == (200, output_dim)
    assert jnp.allclose(out_big, ref_big, atol=3e-2, rtol=3e-2), "big-batch mismatch"

    print("KERNEL_OK")
</pallas_src>

<mosaic_0001>
module attributes {stable_mosaic.version = 11 : i64} {
  func.func @kernel(%arg0: i32, %arg1: memref<8x4xf32, #tpu.memory_space<vmem>>, %arg2: memref<4x128xbf16, #tpu.memory_space<vmem>>, %arg3: memref<1x128xf32, #tpu.memory_space<vmem>>, %arg4: memref<128x128xbf16, #tpu.memory_space<vmem>>, %arg5: memref<1x128xf32, #tpu.memory_space<vmem>>, %arg6: memref<128x128xbf16, #tpu.memory_space<vmem>>, %arg7: memref<1x128xf32, #tpu.memory_space<vmem>>, %arg8: memref<128x128xbf16, #tpu.memory_space<vmem>>, %arg9: memref<1x128xf32, #tpu.memory_space<vmem>>, %arg10: memref<128x2xbf16, #tpu.memory_space<vmem>>, %arg11: memref<1x2xf32, #tpu.memory_space<vmem>>, %arg12: memref<8x2xf32, #tpu.memory_space<vmem>>) attributes {dimension_semantics = [#tpu.dimension_semantics<parallel>], iteration_bounds = array<i64: 1>, scalar_prefetch = 0 : i64, scratch_operands = 0 : i64, tpu.core_type = #tpu.core_type<tc>, window_params = [{transform_indices = @transform_0, window_bounds = array<i64: 8, 4>}, {pipeline_mode = #tpu.pipeline_mode<synchronous>, transform_indices = @transform_1, window_bounds = array<i64: 4, 128>}, {pipeline_mode = #tpu.pipeline_mode<synchronous>, transform_indices = @transform_2, window_bounds = array<i64: 1, 128>}, {pipeline_mode = #tpu.pipeline_mode<synchronous>, transform_indices = @transform_3, window_bounds = array<i64: 128, 128>}, {pipeline_mode = #tpu.pipeline_mode<synchronous>, transform_indices = @transform_4, window_bounds = array<i64: 1, 128>}, {pipeline_mode = #tpu.pipeline_mode<synchronous>, transform_indices = @transform_5, window_bounds = array<i64: 128, 128>}, {pipeline_mode = #tpu.pipeline_mode<synchronous>, transform_indices = @transform_6, window_bounds = array<i64: 1, 128>}, {pipeline_mode = #tpu.pipeline_mode<synchronous>, transform_indices = @transform_7, window_bounds = array<i64: 128, 128>}, {pipeline_mode = #tpu.pipeline_mode<synchronous>, transform_indices = @transform_8, window_bounds = array<i64: 1, 128>}, {pipeline_mode = #tpu.pipeline_mode<synchronous>, transform_indices = @transform_9, window_bounds = array<i64: 128, 2>}, {pipeline_mode = #tpu.pipeline_mode<synchronous>, transform_indices = @transform_10, window_bounds = array<i64: 1, 2>}, {transform_indices = @transform_11, window_bounds = array<i64: 8, 2>}]} {
    %c0 = arith.constant 0 : index
    %c0_0 = arith.constant 0 : index
    %0 = vector.load %arg1[%c0, %c0_0] : memref<8x4xf32, #tpu.memory_space<vmem>>, vector<8x4xf32>
    %1 = arith.truncf %0 : vector<8x4xf32> to vector<8x4xbf16>
    %c0_1 = arith.constant 0 : index
    %c0_2 = arith.constant 0 : index
    %2 = vector.load %arg2[%c0_1, %c0_2] : memref<4x128xbf16, #tpu.memory_space<vmem>>, vector<4x128xbf16>
    %cst = arith.constant dense<0.000000e+00> : vector<8x128xf32>
    %3 = tpu.matmul %1, %2, %cst {dimension_numbers = #tpu.dot_dimension_numbers<[1], [0], [0], [1], [0, 0, 1, 1], [], []>} : vector<8x4xbf16>, vector<4x128xbf16>, vector<8x128xf32> -> vector<8x128xf32>
    %c0_3 = arith.constant 0 : index
    %c0_4 = arith.constant 0 : index
    %4 = vector.load %arg3[%c0_3, %c0_4] : memref<1x128xf32, #tpu.memory_space<vmem>>, vector<1x128xf32>
    %5 = vector.broadcast %4 : vector<1x128xf32> to vector<8x128xf32>
    %6 = arith.addf %3, %5 : vector<8x128xf32>
    %7 = arith.truncf %6 : vector<8x128xf32> to vector<8x128xbf16>
    %8 = math.tanh %7 : vector<8x128xbf16>
    %c0_5 = arith.constant 0 : index
    %c0_6 = arith.constant 0 : index
    %9 = vector.load %arg4[%c0_5, %c0_6] : memref<128x128xbf16, #tpu.memory_space<vmem>>, vector<128x128xbf16>
    %cst_7 = arith.constant dense<0.000000e+00> : vector<8x128xf32>
    %10 = tpu.matmul %8, %9, %cst_7 {dimension_numbers = #tpu.dot_dimension_numbers<[1], [0], [0], [1], [0, 0, 1, 1], [], []>} : vector<8x128xbf16>, vector<128x128xbf16>, vector<8x128xf32> -> vector<8x128xf32>
    %c0_8 = arith.constant 0 : index
    %c0_9 = arith.constant 0 : index
    %11 = vector.load %arg5[%c0_8, %c0_9] : memref<1x128xf32, #tpu.memory_space<vmem>>, vector<1x128xf32>
    %12 = vector.broadcast %11 : vector<1x128xf32> to vector<8x128xf32>
    %13 = arith.addf %10, %12 : vector<8x128xf32>
    %14 = arith.truncf %13 : vector<8x128xf32> to vector<8x128xbf16>
    %15 = math.tanh %14 : vector<8x128xbf16>
    %c0_10 = arith.constant 0 : index
    %c0_11 = arith.constant 0 : index
    %16 = vector.load %arg6[%c0_10, %c0_11] : memref<128x128xbf16, #tpu.memory_space<vmem>>, vector<128x128xbf16>
    %cst_12 = arith.constant dense<0.000000e+00> : vector<8x128xf32>
    %17 = tpu.matmul %15, %16, %cst_12 {dimension_numbers = #tpu.dot_dimension_numbers<[1], [0], [0], [1], [0, 0, 1, 1], [], []>} : vector<8x128xbf16>, vector<128x128xbf16>, vector<8x128xf32> -> vector<8x128xf32>
    %c0_13 = arith.constant 0 : index
    %c0_14 = arith.constant 0 : index
    %18 = vector.load %arg7[%c0_13, %c0_14] : memref<1x128xf32, #tpu.memory_space<vmem>>, vector<1x128xf32>
    %19 = vector.broadcast %18 : vector<1x128xf32> to vector<8x128xf32>
    %20 = arith.addf %17, %19 : vector<8x128xf32>
    %21 = arith.truncf %20 : vector<8x128xf32> to vector<8x128xbf16>
    %22 = math.tanh %21 : vector<8x128xbf16>
    %c0_15 = arith.constant 0 : index
    %c0_16 = arith.constant 0 : index
    %23 = vector.load %arg8[%c0_15, %c0_16] : memref<128x128xbf16, #tpu.memory_space<vmem>>, vector<128x128xbf16>
    %cst_17 = arith.constant dense<0.000000e+00> : vector<8x128xf32>
    %24 = tpu.matmul %22, %23, %cst_17 {dimension_numbers = #tpu.dot_dimension_numbers<[1], [0], [0], [1], [0, 0, 1, 1], [], []>} : vector<8x128xbf16>, vector<128x128xbf16>, vector<8x128xf32> -> vector<8x128xf32>
    %c0_18 = arith.constant 0 : index
    %c0_19 = arith.constant 0 : index
    %25 = vector.load %arg9[%c0_18, %c0_19] : memref<1x128xf32, #tpu.memory_space<vmem>>, vector<1x128xf32>
    %26 = vector.broadcast %25 : vector<1x128xf32> to vector<8x128xf32>
    %27 = arith.addf %24, %26 : vector<8x128xf32>
    %28 = arith.truncf %27 : vector<8x128xf32> to vector<8x128xbf16>
    %29 = math.tanh %28 : vector<8x128xbf16>
    %c0_20 = arith.constant 0 : index
    %c0_21 = arith.constant 0 : index
    %30 = vector.load %arg10[%c0_20, %c0_21] : memref<128x2xbf16, #tpu.memory_space<vmem>>, vector<128x2xbf16>
    %cst_22 = arith.constant dense<0.000000e+00> : vector<8x2xf32>
    %31 = tpu.matmul %29, %30, %cst_22 {dimension_numbers = #tpu.dot_dimension_numbers<[1], [0], [0], [1], [0, 0, 1, 1], [], []>} : vector<8x128xbf16>, vector<128x2xbf16>, vector<8x2xf32> -> vector<8x2xf32>
    %c0_23 = arith.constant 0 : index
    %c0_24 = arith.constant 0 : index
    %32 = vector.load %arg11[%c0_23, %c0_24] : memref<1x2xf32, #tpu.memory_space<vmem>>, vector<1x2xf32>
    %33 = vector.broadcast %32 : vector<1x2xf32> to vector<8x2xf32>
    %34 = arith.addf %31, %33 : vector<8x2xf32>
    %c0_25 = arith.constant 0 : index
    %c0_26 = arith.constant 0 : index
    %35 = vector.load %arg12[%c0_25, %c0_26] : memref<8x2xf32, #tpu.memory_space<vmem>>, vector<8x2xf32>
    tpu.vector_store %arg12[%c0_25, %c0_26], %34 {strides = array<i32>} : memref<8x2xf32, #tpu.memory_space<vmem>>, vector<8x2xf32>,
    return
  }
  func.func @transform_0(%arg0: i32) -> (i32, i32) {
    %c0_i32 = arith.constant 0 : i32
    %c0_i32_0 = arith.constant 0 : i32
    return %arg0, %c0_i32 : i32, i32
  }
  func.func @transform_1(%arg0: i32) -> (i32, i32) {
    %c0_i32 = arith.constant 0 : i32
    %c0_i32_0 = arith.constant 0 : i32
    %c0_i32_1 = arith.constant 0 : i32
    return %c0_i32, %c0_i32_0 : i32, i32
  }
  func.func @transform_2(%arg0: i32) -> (i32, i32) {
    %c0_i32 = arith.constant 0 : i32
    %c0_i32_0 = arith.constant 0 : i32
    %c0_i32_1 = arith.constant 0 : i32
    return %c0_i32, %c0_i32_0 : i32, i32
  }
  func.func @transform_3(%arg0: i32) -> (i32, i32) {
    %c0_i32 = arith.constant 0 : i32
    %c0_i32_0 = arith.constant 0 : i32
    %c0_i32_1 = arith.constant 0 : i32
    return %c0_i32, %c0_i32_0 : i32, i32
  }
  func.func @transform_4(%arg0: i32) -> (i32, i32) {
    %c0_i32 = arith.constant 0 : i32
    %c0_i32_0 = arith.constant 0 : i32
    %c0_i32_1 = arith.constant 0 : i32
    return %c0_i32, %c0_i32_0 : i32, i32
  }
  func.func @transform_5(%arg0: i32) -> (i32, i32) {
    %c0_i32 = arith.constant 0 : i32
    %c0_i32_0 = arith.constant 0 : i32
    %c0_i32_1 = arith.constant 0 : i32
    return %c0_i32, %c0_i32_0 : i32, i32
  }
  func.func @transform_6(%arg0: i32) -> (i32, i32) {
    %c0_i32 = arith.constant 0 : i32
    %c0_i32_0 = arith.constant 0 : i32
    %c0_i32_1 = arith.constant 0 : i32
    return %c0_i32, %c0_i32_0 : i32, i32
  }
  func.func @transform_7(%arg0: i32) -> (i32, i32) {
    %c0_i32 = arith.constant 0 : i32
    %c0_i32_0 = arith.constant 0 : i32
    %c0_i32_1 = arith.constant 0 : i32
    return %c0_i32, %c0_i32_0 : i32, i32
  }
  func.func @transform_8(%arg0: i32) -> (i32, i32) {
    %c0_i32 = arith.constant 0 : i32
    %c0_i32_0 = arith.constant 0 : i32
    %c0_i32_1 = arith.constant 0 : i32
    return %c0_i32, %c0_i32_0 : i32, i32
  }
  func.func @transform_9(%arg0: i32) -> (i32, i32) {
    %c0_i32 = arith.constant 0 : i32
    %c0_i32_0 = arith.constant 0 : i32
    %c0_i32_1 = arith.constant 0 : i32
    return %c0_i32, %c0_i32_0 : i32, i32
  }
  func.func @transform_10(%arg0: i32) -> (i32, i32) {
    %c0_i32 = arith.constant 0 : i32
    %c0_i32_0 = arith.constant 0 : i32
    %c0_i32_1 = arith.constant 0 : i32
    return %c0_i32, %c0_i32_0 : i32, i32
  }
  func.func @transform_11(%arg0: i32) -> (i32, i32) {
    %c0_i32 = arith.constant 0 : i32
    %c0_i32_0 = arith.constant 0 : i32
    return %arg0, %c0_i32 : i32, i32
  }
}

</mosaic_0001>

<llo_original>
// kernel: tpu_custom_call.1
$region0: #{tpu_custom_call.1}
  #allocation0 [shape = 'u32[]', space=smem, size = 0x4, offset = 0x4, fixed_abs, tag = 'smem constant byte address 0x4 - core index']
  #allocation1 [shape = 'u32[72,128]{1,0:T(1,128)}', space=vmem, size = 0x9000, scoped, tag = 'internal scratch']
  %s0 = inlined_call_operand.vmem [shape: f32[8,4], index: 0, kind: input, shape index: {}]
  %s1 = inlined_call_operand.vmem [shape: bf16[4,128], index: 1, kind: input, shape index: {}]
  %s2 = inlined_call_operand.vmem [shape: f32[1,128], index: 2, kind: input, shape index: {}]
  %s3 = inlined_call_operand.vmem [shape: bf16[128,128], index: 3, kind: input, shape index: {}]
  %s4 = inlined_call_operand.vmem [shape: f32[1,128], index: 4, kind: input, shape index: {}]
  %s5 = inlined_call_operand.hbm [shape: bf16[128,128], index: 5, kind: input, shape index: {}]
  %s6 = inlined_call_operand.vmem [shape: f32[1,128], index: 6, kind: input, shape index: {}]
  %s7 = inlined_call_operand.hbm [shape: bf16[128,128], index: 7, kind: input, shape index: {}]
  %s8 = inlined_call_operand.vmem [shape: f32[1,128], index: 8, kind: input, shape index: {}]
  %s9 = inlined_call_operand.vmem [shape: bf16[128,2], index: 9, kind: input, shape index: {}]
  %s10 = inlined_call_operand.vmem [shape: f32[1,2], index: 10, kind: input, shape index: {}]
  %s11 = inlined_call_operand.vmem [shape: f32[8,2], index: 11, kind: output, shape index: {}]
  %s12 = sld [smem:[#allocation0]]
  $region62: #{tpu_custom_call.1} parent=0
    _
  %s14 = ssub.s32 1, %s12
  %s15 = scalar_select 0, %s14, %s12
  $region1: #{tpu_custom_call.1} parent=0
    #allocation2 [shape = 'u8[32768]{0}', space=vmem, size = 0x8000, scoped, tag = 'input window, operand 5, single buffered']
    #allocation3 [shape = 's32[1]{0}', space=sflag, size = 0x4, scoped, tag = 'scoped memory for tpu_custom_call.1']
    #allocation4 [shape = 'u8[32768]{0}', space=vmem, size = 0x8000, scoped, tag = 'input window, operand 7, single buffered']
    #allocation5 [shape = 's32[1]{0}', space=sflag, size = 0x4, scoped, tag = 'scoped memory for tpu_custom_call.1']
    %16 = vsyncpa [#allocation3], 0
    %17 = vsyncpa [#allocation5], 0
    // Predicated region
    $region2: #{tpu_custom_call.1} parent=1 // pred_check
      _
    $region3: #{tpu_custom_call.1} parent=1 // pred_check_branch
      %19 = sbr.rel (0) target = $region5
    $region4: #{tpu_custom_call.1} parent=1 // pred_region
      _
    $region5: #{tpu_custom_call.1} parent=1 // pred_fallthru
      _
    // Predicated region
    $region6: #{tpu_custom_call.1} parent=1 // pred_check
      _
    $region7: #{tpu_custom_call.1} parent=1 // pred_check_branch
      %21 = sbr.rel (0) target = $region9
    $region8: #{tpu_custom_call.1} parent=1 // pred_region
      _
    $region9: #{tpu_custom_call.1} parent=1 // pred_fallthru
      _
    // Predicated region
    $region10: #{tpu_custom_call.1} parent=1 // pred_check
      _
    $region11: #{tpu_custom_call.1} parent=1 // pred_check_branch
      %23 = sbr.rel (0) target = $region13
    $region12: #{tpu_custom_call.1} parent=1 // pred_region
      _
    $region13: #{tpu_custom_call.1} parent=1 // pred_fallthru
      _
    // Predicated region
    $region14: #{tpu_custom_call.1} parent=1 // pred_check
      _
    $region15: #{tpu_custom_call.1} parent=1 // pred_check_branch
      %25 = sbr.rel (0) target = $region17
    $region16: #{tpu_custom_call.1} parent=1 // pred_region
      _
    $region17: #{tpu_custom_call.1} parent=1 // pred_fallthru
      _
    // Predicated region
    $region18: #{tpu_custom_call.1} parent=1 // pred_check
      _
    $region19: #{tpu_custom_call.1} parent=1 // pred_check_branch
      %27 = sbr.rel (0) target = $region21
    $region20: #{tpu_custom_call.1} parent=1 // pred_region
      _
    $region21: #{tpu_custom_call.1} parent=1 // pred_fallthru
      _
    // Predicated region
    $region22: #{tpu_custom_call.1} parent=1 // pred_check
      _
    $region23: #{tpu_custom_call.1} parent=1 // pred_check_branch
      %29 = sbr.rel (0) target = $region25
    $region24: #{tpu_custom_call.1} parent=1 // pred_region
      %31 = vsyncadd [#allocation3], 0
      %s32 = sshll.u32 %s5, 4
      %s33 = int_to_ptr.hbm [resolvable:$true] %s32
      %s34 = sshll.u32 [#allocation2], 4
      %s35 = int_to_ptr.vmem [resolvable:$true] %s34
      %40 = dma.hbm_to_vmem [thread:$0]  %s33, 1024, %s35, [#allocation3], 64, 64, 4
    $region25: #{tpu_custom_call.1} parent=1 // pred_fallthru
      _
    // Predicated region
    $region26: #{tpu_custom_call.1} parent=1 // pred_check
      _
    $region27: #{tpu_custom_call.1} parent=1 // pred_check_branch
      %42 = sbr.rel (0) target = $region29
    $region28: #{tpu_custom_call.1} parent=1 // pred_region
      _
    $region29: #{tpu_custom_call.1} parent=1 // pred_fallthru
      _
    // Predicated region
    $region30: #{tpu_custom_call.1} parent=1 // pred_check
      _
    $region31: #{tpu_custom_call.1} parent=1 // pred_check_branch
      %44 = sbr.rel (0) target = $region33
    $region32: #{tpu_custom_call.1} parent=1 // pred_region
      %46 = vsyncadd [#allocation5], 0
      %s47 = sshll.u32 %s7, 4
      %s48 = int_to_ptr.hbm [resolvable:$true] %s47
      %s49 = sshll.u32 [#allocation4], 4
      %s50 = int_to_ptr.vmem [resolvable:$true] %s49
      %55 = dma.hbm_to_vmem [thread:$0]  %s48, 1024, %s50, [#allocation5], 64, 64, 4
    $region33: #{tpu_custom_call.1} parent=1 // pred_fallthru
      _
    // Predicated region
    $region34: #{tpu_custom_call.1} parent=1 // pred_check
      _
    $region35: #{tpu_custom_call.1} parent=1 // pred_check_branch
      %57 = sbr.rel (0) target = $region37
    $region36: #{tpu_custom_call.1} parent=1 // pred_region
      _
    $region37: #{tpu_custom_call.1} parent=1 // pred_fallthru
      _
    // Predicated region
    $region38: #{tpu_custom_call.1} parent=1 // pred_check
      _
    $region39: #{tpu_custom_call.1} parent=1 // pred_check_branch
      %59 = sbr.rel (0) target = $region41
    $region40: #{tpu_custom_call.1} parent=1 // pred_region
      _
    $region41: #{tpu_custom_call.1} parent=1 // pred_fallthru
      _
    // Predicated region
    $region42: #{tpu_custom_call.1} parent=1 // pred_check
      _
    $region43: #{tpu_custom_call.1} parent=1 // pred_check_branch
      %61 = sbr.rel (0) target = $region45
    $region44: #{tpu_custom_call.1} parent=1 // pred_region
      _
    $region45: #{tpu_custom_call.1} parent=1 // pred_fallthru
      _
    // Predicated region
    $region46: #{tpu_custom_call.1} parent=1 // pred_check
      _
    $region47: #{tpu_custom_call.1} parent=1 // pred_check_branch
      %63 = sbr.rel (0) target = $region49
    $region48: #{tpu_custom_call.1} parent=1 // pred_region
      %65 = dma.done [#allocation3], 1024
    $region49: #{tpu_custom_call.1} parent=1 // pred_fallthru
      _
    // Predicated region
    $region50: #{tpu_custom_call.1} parent=1 // pred_check
      _
    $region51: #{tpu_custom_call.1} parent=1 // pred_check_branch
      %67 = sbr.rel (0) target = $region53
    $region52: #{tpu_custom_call.1} parent=1 // pred_region
      %69 = dma.done [#allocation5], 1024
    $region53: #{tpu_custom_call.1} parent=1 // pred_fallthru
      _
    %v71 = vld [vmem:[%s0] sm:$0xff]
    %v72 = vpack.c.bf16 %v71, %v71
    %v73 = vld [vmem:[%s1] sm:$0x3]
    %v74 = vld [vmem:[%s2] sm:$0x1]
    %v76 = vperm.slane %v74, 0
    %vm78 = vcmask 31744
    %v80 = vsel %vm78, %v72, 0
    %vm82 = vcmask 1041408
    %v84 = vsel %vm82, %v73, 0
    %86 = vmatpush.bf16.msra.mxu0 0
    %87 = vmatpush.bf16.msra.mxu0 0
    %88 = vmatpush.bf16.msra.mxu0 0
    %89 = vmatpush.bf16.msra.mxu0 0
    %90 = vmatpush.bf16.msra.mxu0 0
    %91 = vmatpush.bf16.msra.mxu0 0
    %92 = vmatpush.bf16.msra.mxu0 0
    %93 = vmatpush.bf16.msra.mxu0 %v84
    %94 = vmatmul.bf16.gmra.mxu0 %v80
    %v95 = vpop.f32.mrf.mxu0
    %v96 = vadd.f32 %v76, %v95
    %v97 = vpop.f32.mrf.mxu0
    %98 = vdwg.mxu0
    %v99 = vpack.c.bf16 %v96, %v96
    %v100 = vunpack.c.l.bf16 %v99
    %v101 = vtanh.pop %v100
    %v102 = vpack.c.bf16 %v101, %v101
    %v103 = vld [vmem:[%s3] sm:$0xf]
    %v104 = vld [vmem:[%s3 + $0x4] sm:$0xf]
    %v105 = vld [vmem:[%s3 + $0x8] sm:$0xf]
    %v106 = vld [vmem:[%s3 + $0xc] sm:$0xf]
    %v107 = vld [vmem:[%s3 + $0x10] sm:$0xf]
    %v108 = vld [vmem:[%s3 + $0x14] sm:$0xf]
    %v109 = vld [vmem:[%s3 + $0x18] sm:$0xf]
    %v110 = vld [vmem:[%s3 + $0x1c] sm:$0xf]
    %v111 = vld [vmem:[%s3 + $0x20] sm:$0xf]
    %v112 = vld [vmem:[%s3 + $0x24] sm:$0xf]
    %v113 = vld [vmem:[%s3 + $0x28] sm:$0xf]
    %v114 = vld [vmem:[%s3 + $0x2c] sm:$0xf]
    %v115 = vld [vmem:[%s3 + $0x30] sm:$0xf]
    %v116 = vld [vmem:[%s3 + $0x34] sm:$0xf]
    %v117 = vld [vmem:[%s3 + $0x38] sm:$0xf]
    %v118 = vld [vmem:[%s3 + $0x3c] sm:$0xf]
    %v119 = vld [vmem:[%s4] sm:$0x1]
    %v121 = vperm.slane %v119, 0
    %v139 = vunpack.c.l.b16 %v103
    %v140 = vunpack.c.l.b16 %v104
    %v141 = vunpack.c.l.b16 %v105
    %v142 = vunpack.c.l.b16 %v106
    %v143 = vunpack.c.l.b16 %v107
    %v144 = vunpack.c.l.b16 %v108
    %v145 = vunpack.c.l.b16 %v109
    %v146 = vunpack.c.l.b16 %v110
    %v147 = vunpack.c.l.b16 %v111
    %v148 = vunpack.c.l.b16 %v112
    %v149 = vunpack.c.l.b16 %v113
    %v150 = vunpack.c.l.b16 %v114
    %v151 = vunpack.c.l.b16 %v115
    %v152 = vunpack.c.l.b16 %v116
    %v153 = vunpack.c.l.b16 %v117
    %v154 = vunpack.c.l.b16 %v118
    %v155 = vpack.c.b16 %v140, %v139
    %v156 = vpack.c.b16 %v142, %v141
    %v157 = vpack.c.b16 %v144, %v143
    %v158 = vpack.c.b16 %v146, %v145
    %v159 = vpack.c.b16 %v148, %v147
    %v160 = vpack.c.b16 %v150, %v149
    %v161 = vpack.c.b16 %v152, %v151
    %v162 = vpack.c.b16 %v154, %v153
    %171 = vmatpush.bf16.msra.mxu0 %v162
    %172 = vmatpush.bf16.msra.mxu0 %v161
    %173 = vmatpush.bf16.msra.mxu0 %v160
    %174 = vmatpush.bf16.msra.mxu0 %v159
    %175 = vmatpush.bf16.msra.mxu0 %v158
    %176 = vmatpush.bf16.msra.mxu0 %v157
    %177 = vmatpush.bf16.msra.mxu0 %v156
    %178 = vmatpush.bf16.msra.mxu0 %v155
    %179 = vmatmul.bf16.gmra.mxu0 %v102
    %v180 = vpop.f32.mrf.mxu0
    %v181 = vadd.f32 %v121, %v180
    %v182 = vpop.f32.mrf.mxu0
    %183 = vdwg.mxu0
    %v184 = vpack.c.bf16 %v181, %v181
    %v185 = vunpack.c.l.bf16 %v184
    %v186 = vtanh.pop %v185
    %v187 = vpack.c.bf16 %v186, %v186
    %v188 = vld [vmem:[#allocation2] sm:$0xf]
    %v189 = vld [vmem:[#allocation2 + $0x4] sm:$0xf]
    %v190 = vld [vmem:[#allocation2 + $0x8] sm:$0xf]
    %v191 = vld [vmem:[#allocation2 + $0xc] sm:$0xf]
    %v192 = vld [vmem:[#allocation2 + $0x10] sm:$0xf]
    %v193 = vld [vmem:[#allocation2 + $0x14] sm:$0xf]
    %v194 = vld [vmem:[#allocation2 + $0x18] sm:$0xf]
    %v195 = vld [vmem:[#allocation2 + $0x1c] sm:$0xf]
    %v196 = vld [vmem:[#allocation2 + $0x20] sm:$0xf]
    %v197 = vld [vmem:[#allocation2 + $0x24] sm:$0xf]
    %v198 = vld [vmem:[#allocation2 + $0x28] sm:$0xf]
    %v199 = vld [vmem:[#allocation2 + $0x2c] sm:$0xf]
    %v200 = vld [vmem:[#allocation2 + $0x30] sm:$0xf]
    %v201 = vld [vmem:[#allocation2 + $0x34] sm:$0xf]
    %v202 = vld [vmem:[#allocation2 + $0x38] sm:$0xf]
    %v203 = vld [vmem:[#allocation2 + $0x3c] sm:$0xf]
    %v204 = vld [vmem:[%s6] sm:$0x1]
    %v206 = vperm.slane %v204, 0
    %v224 = vunpack.c.l.b16 %v188
    %v225 = vunpack.c.l.b16 %v189
    %v226 = vunpack.c.l.b16 %v190
    %v227 = vunpack.c.l.b16 %v191
    %v228 = vunpack.c.l.b16 %v192
    %v229 = vunpack.c.l.b16 %v193
    %v230 = vunpack.c.l.b16 %v194
    %v231 = vunpack.c.l.b16 %v195
    %v232 = vunpack.c.l.b16 %v196
    %v233 = vunpack.c.l.b16 %v197
    %v234 = vunpack.c.l.b16 %v198
    %v235 = vunpack.c.l.b16 %v199
    %v236 = vunpack.c.l.b16 %v200
    %v237 = vunpack.c.l.b16 %v201
    %v238 = vunpack.c.l.b16 %v202
    %v239 = vunpack.c.l.b16 %v203
    %v240 = vpack.c.b16 %v225, %v224
    %v241 = vpack.c.b16 %v227, %v226
    %v242 = vpack.c.b16 %v229, %v228
    %v243 = vpack.c.b16 %v231, %v230
    %v244 = vpack.c.b16 %v233, %v232
    %v245 = vpack.c.b16 %v235, %v234
    %v246 = vpack.c.b16 %v237, %v236
    %v247 = vpack.c.b16 %v239, %v238
    %256 = vmatpush.bf16.msra.mxu0 %v247
    %257 = vmatpush.bf16.msra.mxu0 %v246
    %258 = vmatpush.bf16.msra.mxu0 %v245
    %259 = vmatpush.bf16.msra.mxu0 %v244
    %260 = vmatpush.bf16.msra.mxu0 %v243
    %261 = vmatpush.bf16.msra.mxu0 %v242
    %262 = vmatpush.bf16.msra.mxu0 %v241
    %263 = vmatpush.bf16.msra.mxu0 %v240
    %264 = vmatmul.bf16.gmra.mxu0 %v187
    %v265 = vpop.f32.mrf.mxu0
    %v266 = vadd.f32 %v206, %v265
    %v267 = vpop.f32.mrf.mxu0
    %268 = vdwg.mxu0
    %v269 = vpack.c.bf16 %v266, %v266
    %v270 = vunpack.c.l.bf16 %v269
    %v271 = vtanh.pop %v270
    %v272 = vpack.c.bf16 %v271, %v271
    %v273 = vld [vmem:[#allocation4] sm:$0xf]
    %v274 = vld [vmem:[#allocation4 + $0x4] sm:$0xf]
    %v275 = vld [vmem:[#allocation4 + $0x8] sm:$0xf]
    %v276 = vld [vmem:[#allocation4 + $0xc] sm:$0xf]
    %v277 = vld [vmem:[#allocation4 + $0x10] sm:$0xf]
    %v278 = vld [vmem:[#allocation4 + $0x14] sm:$0xf]
    %v279 = vld [vmem:[#allocation4 + $0x18] sm:$0xf]
    %v280 = vld [vmem:[#allocation4 + $0x1c] sm:$0xf]
    %v281 = vld [vmem:[#allocation4 + $0x20] sm:$0xf]
    %v282 = vld [vmem:[#allocation4 + $0x24] sm:$0xf]
    %v283 = vld [vmem:[#allocation4 + $0x28] sm:$0xf]
    %v284 = vld [vmem:[#allocation4 + $0x2c] sm:$0xf]
    %v285 = vld [vmem:[#allocation4 + $0x30] sm:$0xf]
    %v286 = vld [vmem:[#allocation4 + $0x34] sm:$0xf]
    %v287 = vld [vmem:[#allocation4 + $0x38] sm:$0xf]
    %v288 = vld [vmem:[#allocation4 + $0x3c] sm:$0xf]
    %v289 = vld [vmem:[%s8] sm:$0x1]
    %v291 = vperm.slane %v289, 0
    %v309 = vunpack.c.l.b16 %v273
    %v310 = vunpack.c.l.b16 %v274
    %v311 = vunpack.c.l.b16 %v275
    %v312 = vunpack.c.l.b16 %v276
    %v313 = vunpack.c.l.b16 %v277
    %v314 = vunpack.c.l.b16 %v278
    %v315 = vunpack.c.l.b16 %v279
    %v316 = vunpack.c.l.b16 %v280
    %v317 = vunpack.c.l.b16 %v281
    %v318 = vunpack.c.l.b16 %v282
    %v319 = vunpack.c.l.b16 %v283
    %v320 = vunpack.c.l.b16 %v284
    %v321 = vunpack.c.l.b16 %v285
    %v322 = vunpack.c.l.b16 %v286
    %v323 = vunpack.c.l.b16 %v287
    %v324 = vunpack.c.l.b16 %v288
    %v325 = vpack.c.b16 %v310, %v309
    %v326 = vpack.c.b16 %v312, %v311
    %v327 = vpack.c.b16 %v314, %v313
    %v328 = vpack.c.b16 %v316, %v315
    %v329 = vpack.c.b16 %v318, %v317
    %v330 = vpack.c.b16 %v320, %v319
    %v331 = vpack.c.b16 %v322, %v321
    %v332 = vpack.c.b16 %v324, %v323
    %341 = vmatpush.bf16.msra.mxu0 %v332
    %342 = vmatpush.bf16.msra.mxu0 %v331
    %343 = vmatpush.bf16.msra.mxu0 %v330
    %344 = vmatpush.bf16.msra.mxu0 %v329
    %345 = vmatpush.bf16.msra.mxu0 %v328
    %346 = vmatpush.bf16.msra.mxu0 %v327
    %347 = vmatpush.bf16.msra.mxu0 %v326
    %348 = vmatpush.bf16.msra.mxu0 %v325
    %349 = vmatmul.bf16.gmra.mxu0 %v272
    %v350 = vpop.f32.mrf.mxu0
    %v351 = vadd.f32 %v291, %v350
    %v352 = vpop.f32.mrf.mxu0
    %353 = vdwg.mxu0
    %v354 = vpack.c.bf16 %v351, %v351
    %v355 = vunpack.c.l.bf16 %v354
    %v356 = vtanh.pop %v355
    %v357 = vpack.c.bf16 %v356, %v356
    %v358 = vld [vmem:[%s9] sm:$0xf]
    %v359 = vld [vmem:[%s9 + $0x4] sm:$0xf]
    %v360 = vld [vmem:[%s9 + $0x8] sm:$0xf]
    %v361 = vld [vmem:[%s9 + $0xc] sm:$0xf]
    %v362 = vld [vmem:[%s9 + $0x10] sm:$0xf]
    %v363 = vld [vmem:[%s9 + $0x14] sm:$0xf]
    %v364 = vld [vmem:[%s9 + $0x18] sm:$0xf]
    %v365 = vld [vmem:[%s9 + $0x1c] sm:$0xf]
    %v366 = vld [vmem:[%s9 + $0x20] sm:$0xf]
    %v367 = vld [vmem:[%s9 + $0x24] sm:$0xf]
    %v368 = vld [vmem:[%s9 + $0x28] sm:$0xf]
    %v369 = vld [vmem:[%s9 + $0x2c] sm:$0xf]
    %v370 = vld [vmem:[%s9 + $0x30] sm:$0xf]
    %v371 = vld [vmem:[%s9 + $0x34] sm:$0xf]
    %v372 = vld [vmem:[%s9 + $0x38] sm:$0xf]
    %v373 = vld [vmem:[%s9 + $0x3c] sm:$0xf]
    %v374 = vld [vmem:[%s10] sm:$0x1]
    %v376 = vperm.slane %v374, 0
    %v394 = vunpack.c.l.b16 %v358
    %v395 = vunpack.c.l.b16 %v359
    %v396 = vunpack.c.l.b16 %v360
    %v397 = vunpack.c.l.b16 %v361
    %v398 = vunpack.c.l.b16 %v362
    %v399 = vunpack.c.l.b16 %v363
    %v400 = vunpack.c.l.b16 %v364
    %v401 = vunpack.c.l.b16 %v365
    %v402 = vunpack.c.l.b16 %v366
    %v403 = vunpack.c.l.b16 %v367
    %v404 = vunpack.c.l.b16 %v368
    %v405 = vunpack.c.l.b16 %v369
    %v406 = vunpack.c.l.b16 %v370
    %v407 = vunpack.c.l.b16 %v371
    %v408 = vunpack.c.l.b16 %v372
    %v409 = vunpack.c.l.b16 %v373
    %v410 = vpack.c.b16 %v395, %v394
    %v411 = vpack.c.b16 %v397, %v396
    %v412 = vpack.c.b16 %v399, %v398
    %v413 = vpack.c.b16 %v401, %v400
    %v414 = vpack.c.b16 %v403, %v402
    %v415 = vpack.c.b16 %v405, %v404
    %v416 = vpack.c.b16 %v407, %v406
    %v417 = vpack.c.b16 %v409, %v408
    %426 = vmatpush.bf16.msra.mxu0 %v417
    %427 = vmatpush.bf16.msra.mxu0 %v416
    %428 = vmatpush.bf16.msra.mxu0 %v415
    %429 = vmatpush.bf16.msra.mxu0 %v414
    %430 = vmatpush.bf16.msra.mxu0 %v413
    %431 = vmatpush.bf16.msra.mxu0 %v412
    %432 = vmatpush.bf16.msra.mxu0 %v411
    %433 = vmatpush.bf16.msra.mxu0 %v410
    %434 = vmatmul.bf16.gmra.mxu0 %v357
    %v435 = vpop.f32.mrf.mxu0
    %v436 = vadd.f32 %v376, %v435
    %v437 = vpop.f32.mrf.mxu0
    %438 = vdwg.mxu0
    %vm439 = vcmask 15360
    %440 = vst.msk [vmem:[%s11] sm:$0xff] %vm439, %v436
    // Predicated region
    $region54: #{tpu_custom_call.1} parent=1 // pred_check
      _
    $region55: #{tpu_custom_call.1} parent=1 // pred_check_branch
      %442 = sbr.rel (0) target = $region57
    $region56: #{tpu_custom_call.1} parent=1 // pred_region
      _
    $region57: #{tpu_custom_call.1} parent=1 // pred_fallthru
      _
    // Predicated region
    $region58: #{tpu_custom_call.1} parent=1 // pred_check
      _
    $region59: #{tpu_custom_call.1} parent=1 // pred_check_branch
      %444 = sbr.rel (0) target = $region61
    $region60: #{tpu_custom_call.1} parent=1 // pred_region
      _
    $region61: #{tpu_custom_call.1} parent=1 // pred_fallthru
      _
    %445 = vsyncpa [#allocation3], 1
    %446 = vsyncpa [#allocation5], 1

</llo_original>
